<compile_context>
chip_gen: v5e
topology: v5e:2x2
jax: 0.10.0
libtpu: 0.0.40
codegen_flags: <defaults>
</compile_context>

<pallas_src>
import jax
import jax.numpy as jnp
from jax import lax
from jax.experimental import pallas as pl
from jax.experimental.pallas import tpu as pltpu

D_IN, D_H1, D_H2, D_OUT = 64, 256, 128, 1
BN_EPS = 1e-5
LRELU_SLOPE = 0.01
MAX_TILE_B = 1024  # batch tile; per-tile VMEM use is well under the scoped limit


def _round_up(n, m):
    return ((n + m - 1) // m) * m


def _leaky_relu(x):
    # identical to where(x>=0, x, a*x) for slope in (0,1); one fewer VALU op
    return jnp.maximum(x, LRELU_SLOPE * x)


def priord_kernel(
    x_ref,                      # (TILE_B, 64)  bf16
    w1_ref, b1_ref, s1_ref, t1_ref,   # (64,256) bf16, (1,256) f32 x3
    w2_ref, b2_ref, s2_ref, t2_ref,   # (256,128) bf16, (1,128) f32 x3
    w3_ref, b3_ref,             # (1,128) f32, (1,1) f32
    o_ref,                      # (TILE_B, 1) f32
):
    # Block 1: Linear(64,256) -> LeakyReLU -> (Dropout=id) -> folded BN
    h = jnp.dot(x_ref[...], w1_ref[...], preferred_element_type=jnp.float32)
    h = _leaky_relu(h + b1_ref[...])
    h = h * s1_ref[...] + t1_ref[...]

    # Block 2: Linear(256,128) -> LeakyReLU -> (Dropout=id) -> folded BN
    h = jnp.dot(h.astype(jnp.bfloat16), w2_ref[...],
                preferred_element_type=jnp.float32)
    h = _leaky_relu(h + b2_ref[...])
    h = h * s2_ref[...] + t2_ref[...]

    # Block 3: Linear(128,1) as a VPU mul + XLU row-reduce, then sigmoid with
    # the reciprocal on the EUP slot.
    logits = jnp.sum(h * w3_ref[...], axis=-1, keepdims=True) + b3_ref[...]
    o_ref[...] = pl.reciprocal(1.0 + jnp.exp(-logits), approx=True)


def priord_forward(x, fp):
    """x: (B, 64) float32.  fp: folded inference params (see fold_params)."""
    B = x.shape[0]
    tile_b = min(MAX_TILE_B, _round_up(B, 8))
    Bp = _round_up(B, tile_b)
    if Bp != B:
        x = jnp.pad(x, ((0, Bp - B), (0, 0)))
    xb = x.astype(jnp.bfloat16)

    const = lambda i: (0, 0)   # weights / per-feature vectors: resident
    grid = (Bp // tile_b,)

    out = pl.pallas_call(
        priord_kernel,
        out_shape=jax.ShapeDtypeStruct((Bp, D_OUT), jnp.float32),
        grid=grid,
        in_specs=[
            pl.BlockSpec((tile_b, D_IN), lambda i: (i, 0)),   # x tile
            pl.BlockSpec((D_IN, D_H1), const),                # w1 (bf16)
            pl.BlockSpec((1, D_H1), const),                   # b1
            pl.BlockSpec((1, D_H1), const),                   # bn1 scale
            pl.BlockSpec((1, D_H1), const),                   # bn1 shift
            pl.BlockSpec((D_H1, D_H2), const),                # w2 (bf16)
            pl.BlockSpec((1, D_H2), const),                   # b2
            pl.BlockSpec((1, D_H2), const),                   # bn2 scale
            pl.BlockSpec((1, D_H2), const),                   # bn2 shift
            pl.BlockSpec((1, D_H2), const),                   # w3 row
            pl.BlockSpec((1, 1), const),                      # b3
        ],
        out_specs=pl.BlockSpec((tile_b, D_OUT), lambda i: (i, 0)),
        compiler_params=pltpu.CompilerParams(
            dimension_semantics=("parallel",),        # shard batch on v7x TCs
            vmem_limit_bytes=32 * 1024 * 1024,        # safe on v5e's 16 MiB default
        ),
    )(
        xb,
        fp["w1"], fp["b1"], fp["s1"], fp["t1"],
        fp["w2"], fp["b2"], fp["s2"], fp["t2"],
        fp["w3r"], fp["b3"],
    )
    return out[:B]


def init_params(key):
    """Deterministic synthetic init, PyTorch-Linear-like uniform fan-in scaling."""
    ks = jax.random.split(key, 8)

    def lin(kw, kb, fan_in, fan_out):
        bound = 1.0 / jnp.sqrt(fan_in)
        w = jax.random.uniform(kw, (fan_in, fan_out), jnp.float32, -bound, bound)
        b = jax.random.uniform(kb, (1, fan_out), jnp.float32, -bound, bound)
        return w, b

    w1, b1 = lin(ks[0], ks[1], D_IN, D_H1)
    w2, b2 = lin(ks[2], ks[3], D_H1, D_H2)
    w3, b3 = lin(ks[4], ks[5], D_H2, D_OUT)

    # BatchNorm1d: gamma=1, beta=0; running stats perturbed so BN math is
    # actually exercised.
    rm1 = 0.1 * jax.random.normal(ks[6], (1, D_H1), jnp.float32)
    rv1 = 1.0 + 0.1 * jnp.abs(jax.random.normal(ks[7], (1, D_H1), jnp.float32))
    rm2 = 0.1 * jax.random.normal(jax.random.fold_in(ks[6], 1), (1, D_H2), jnp.float32)
    rv2 = 1.0 + 0.1 * jnp.abs(jax.random.normal(jax.random.fold_in(ks[7], 1), (1, D_H2), jnp.float32))

    return dict(
        w1=w1, b1=b1, g1=jnp.ones((1, D_H1), jnp.float32), be1=jnp.zeros((1, D_H1), jnp.float32),
        rm1=rm1, rv1=rv1,
        w2=w2, b2=b2, g2=jnp.ones((1, D_H2), jnp.float32), be2=jnp.zeros((1, D_H2), jnp.float32),
        rm2=rm2, rv2=rv2,
        w3=w3, b3=b3,
    )


def fold_params(p):
    """One-time inference-param fold: bf16 weights + BN folded to scale/shift."""
    s1 = p["g1"] * lax.rsqrt(p["rv1"] + BN_EPS)
    t1 = p["be1"] - p["rm1"] * s1
    s2 = p["g2"] * lax.rsqrt(p["rv2"] + BN_EPS)
    t2 = p["be2"] - p["rm2"] * s2
    return dict(
        w1=p["w1"].astype(jnp.bfloat16), b1=p["b1"], s1=s1, t1=t1,
        w2=p["w2"].astype(jnp.bfloat16), b2=p["b2"], s2=s2, t2=t2,
        w3r=p["w3"].reshape(1, D_H2).astype(jnp.float32), b3=p["b3"],
    )


def priord_ref(x, p):
    """Pure-JAX reference with matching bf16-matmul precision."""
    h = jnp.dot(x.astype(jnp.bfloat16), p["w1"].astype(jnp.bfloat16),
                preferred_element_type=jnp.float32) + p["b1"]
    h = jnp.maximum(h, LRELU_SLOPE * h)
    h = (h - p["rm1"]) * lax.rsqrt(p["rv1"] + BN_EPS) * p["g1"] + p["be1"]
    h = jnp.dot(h.astype(jnp.bfloat16), p["w2"].astype(jnp.bfloat16),
                preferred_element_type=jnp.float32) + p["b2"]
    h = jnp.maximum(h, LRELU_SLOPE * h)
    h = (h - p["rm2"]) * lax.rsqrt(p["rv2"] + BN_EPS) * p["g2"] + p["be2"]
    logits = h @ p["w3"] + p["b3"]
    return jax.nn.sigmoid(logits)


if __name__ == "__main__":
    key = jax.random.PRNGKey(0)
    k_x, k_p = jax.random.split(key)

    B = 8
    x = jax.random.normal(k_x, (B, D_IN), jnp.float32)
    params = init_params(k_p)
    folded = fold_params(params)

    out = priord_forward(x, folded)
    out = jax.block_until_ready(out)

    ref = priord_ref(x, params)
    assert out.shape == (B, D_OUT), out.shape
    max_err = jnp.max(jnp.abs(out - ref))
    # bf16 matmuls + folded BN + approx EUP reciprocal => small, expected drift
    assert max_err < 5e-3, f"max abs err {max_err}"
    print("KERNEL_OK")
</pallas_src>

<mosaic_0001>
module attributes {stable_mosaic.version = 11 : i64} {
  func.func @priord_kernel(%arg0: i32, %arg1: memref<8x64xbf16, #tpu.memory_space<vmem>>, %arg2: memref<64x256xbf16, #tpu.memory_space<vmem>>, %arg3: memref<1x256xf32, #tpu.memory_space<vmem>>, %arg4: memref<1x256xf32, #tpu.memory_space<vmem>>, %arg5: memref<1x256xf32, #tpu.memory_space<vmem>>, %arg6: memref<256x128xbf16, #tpu.memory_space<vmem>>, %arg7: memref<1x128xf32, #tpu.memory_space<vmem>>, %arg8: memref<1x128xf32, #tpu.memory_space<vmem>>, %arg9: memref<1x128xf32, #tpu.memory_space<vmem>>, %arg10: memref<1x128xf32, #tpu.memory_space<vmem>>, %arg11: memref<1x1xf32, #tpu.memory_space<vmem>>, %arg12: memref<8x1xf32, #tpu.memory_space<vmem>>) attributes {dimension_semantics = [#tpu.dimension_semantics<parallel>], iteration_bounds = array<i64: 1>, scalar_prefetch = 0 : i64, scratch_operands = 0 : i64, tpu.core_type = #tpu.core_type<tc>, window_params = [{transform_indices = @transform_0, window_bounds = array<i64: 8, 64>}, {pipeline_mode = #tpu.pipeline_mode<synchronous>, transform_indices = @transform_1, window_bounds = array<i64: 64, 256>}, {pipeline_mode = #tpu.pipeline_mode<synchronous>, transform_indices = @transform_2, window_bounds = array<i64: 1, 256>}, {pipeline_mode = #tpu.pipeline_mode<synchronous>, transform_indices = @transform_3, window_bounds = array<i64: 1, 256>}, {pipeline_mode = #tpu.pipeline_mode<synchronous>, transform_indices = @transform_4, window_bounds = array<i64: 1, 256>}, {pipeline_mode = #tpu.pipeline_mode<synchronous>, transform_indices = @transform_5, window_bounds = array<i64: 256, 128>}, {pipeline_mode = #tpu.pipeline_mode<synchronous>, transform_indices = @transform_6, window_bounds = array<i64: 1, 128>}, {pipeline_mode = #tpu.pipeline_mode<synchronous>, transform_indices = @transform_7, window_bounds = array<i64: 1, 128>}, {pipeline_mode = #tpu.pipeline_mode<synchronous>, transform_indices = @transform_8, window_bounds = array<i64: 1, 128>}, {pipeline_mode = #tpu.pipeline_mode<synchronous>, transform_indices = @transform_9, window_bounds = array<i64: 1, 128>}, {pipeline_mode = #tpu.pipeline_mode<synchronous>, transform_indices = @transform_10, window_bounds = array<i64: 1, 1>}, {transform_indices = @transform_11, window_bounds = array<i64: 8, 1>}]} {
    %c0 = arith.constant 0 : index
    %c0_0 = arith.constant 0 : index
    %0 = vector.load %arg1[%c0, %c0_0] : memref<8x64xbf16, #tpu.memory_space<vmem>>, vector<8x64xbf16>
    %c0_1 = arith.constant 0 : index
    %c0_2 = arith.constant 0 : index
    %1 = vector.load %arg2[%c0_1, %c0_2] : memref<64x256xbf16, #tpu.memory_space<vmem>>, vector<64x256xbf16>
    %cst = arith.constant dense<0.000000e+00> : vector<8x256xf32>
    %2 = tpu.matmul %0, %1, %cst {dimension_numbers = #tpu.dot_dimension_numbers<[1], [0], [0], [1], [0, 0, 1, 1], [], []>} : vector<8x64xbf16>, vector<64x256xbf16>, vector<8x256xf32> -> vector<8x256xf32>
    %c0_3 = arith.constant 0 : index
    %c0_4 = arith.constant 0 : index
    %3 = vector.load %arg3[%c0_3, %c0_4] : memref<1x256xf32, #tpu.memory_space<vmem>>, vector<1x256xf32>
    %4 = vector.broadcast %3 : vector<1x256xf32> to vector<8x256xf32>
    %5 = arith.addf %2, %4 : vector<8x256xf32>
    %cst_5 = arith.constant 0.00999999977 : f32
    %6 = vector.broadcast %cst_5 : f32 to vector<8x256xf32>
    %7 = arith.mulf %6, %5 : vector<8x256xf32>
    %8 = arith.maximumf %5, %7 : vector<8x256xf32>
    %c0_6 = arith.constant 0 : index
    %c0_7 = arith.constant 0 : index
    %9 = vector.load %arg4[%c0_6, %c0_7] : memref<1x256xf32, #tpu.memory_space<vmem>>, vector<1x256xf32>
    %10 = vector.broadcast %9 : vector<1x256xf32> to vector<8x256xf32>
    %11 = arith.mulf %8, %10 : vector<8x256xf32>
    %c0_8 = arith.constant 0 : index
    %c0_9 = arith.constant 0 : index
    %12 = vector.load %arg5[%c0_8, %c0_9] : memref<1x256xf32, #tpu.memory_space<vmem>>, vector<1x256xf32>
    %13 = vector.broadcast %12 : vector<1x256xf32> to vector<8x256xf32>
    %14 = arith.addf %11, %13 : vector<8x256xf32>
    %15 = arith.truncf %14 : vector<8x256xf32> to vector<8x256xbf16>
    %c0_10 = arith.constant 0 : index
    %c0_11 = arith.constant 0 : index
    %16 = vector.load %arg6[%c0_10, %c0_11] : memref<256x128xbf16, #tpu.memory_space<vmem>>, vector<256x128xbf16>
    %cst_12 = arith.constant dense<0.000000e+00> : vector<8x128xf32>
    %17 = tpu.matmul %15, %16, %cst_12 {dimension_numbers = #tpu.dot_dimension_numbers<[1], [0], [0], [1], [0, 0, 1, 1], [], []>} : vector<8x256xbf16>, vector<256x128xbf16>, vector<8x128xf32> -> vector<8x128xf32>
    %c0_13 = arith.constant 0 : index
    %c0_14 = arith.constant 0 : index
    %18 = vector.load %arg7[%c0_13, %c0_14] : memref<1x128xf32, #tpu.memory_space<vmem>>, vector<1x128xf32>
    %19 = vector.broadcast %18 : vector<1x128xf32> to vector<8x128xf32>
    %20 = arith.addf %17, %19 : vector<8x128xf32>
    %cst_15 = arith.constant 0.00999999977 : f32
    %21 = vector.broadcast %cst_15 : f32 to vector<8x128xf32>
    %22 = arith.mulf %21, %20 : vector<8x128xf32>
    %23 = arith.maximumf %20, %22 : vector<8x128xf32>
    %c0_16 = arith.constant 0 : index
    %c0_17 = arith.constant 0 : index
    %24 = vector.load %arg8[%c0_16, %c0_17] : memref<1x128xf32, #tpu.memory_space<vmem>>, vector<1x128xf32>
    %25 = vector.broadcast %24 : vector<1x128xf32> to vector<8x128xf32>
    %26 = arith.mulf %23, %25 : vector<8x128xf32>
    %c0_18 = arith.constant 0 : index
    %c0_19 = arith.constant 0 : index
    %27 = vector.load %arg9[%c0_18, %c0_19] : memref<1x128xf32, #tpu.memory_space<vmem>>, vector<1x128xf32>
    %28 = vector.broadcast %27 : vector<1x128xf32> to vector<8x128xf32>
    %29 = arith.addf %26, %28 : vector<8x128xf32>
    %c0_20 = arith.constant 0 : index
    %c0_21 = arith.constant 0 : index
    %30 = vector.load %arg10[%c0_20, %c0_21] : memref<1x128xf32, #tpu.memory_space<vmem>>, vector<1x128xf32>
    %31 = vector.broadcast %30 : vector<1x128xf32> to vector<8x128xf32>
    %32 = arith.mulf %29, %31 : vector<8x128xf32>
    %cst_22 = arith.constant dense<0.000000e+00> : vector<8xf32>
    %33 = vector.multi_reduction <add>, %32, %cst_22 [1] : vector<8x128xf32> to vector<8xf32>
    %34 = vector.shape_cast %33 : vector<8xf32> to vector<8x1xf32>
    %c0_23 = arith.constant 0 : index
    %c0_24 = arith.constant 0 : index
    %35 = vector.load %arg11[%c0_23, %c0_24] : memref<1x1xf32, #tpu.memory_space<vmem>>, vector<1x1xf32>
    %36 = vector.broadcast %35 : vector<1x1xf32> to vector<8x1xf32>
    %37 = arith.addf %34, %36 : vector<8x1xf32>
    %cst_25 = arith.constant 0.000000e+00 : f32
    %38 = vector.broadcast %cst_25 : f32 to vector<8x1xf32>
    %39 = arith.subf %38, %37 : vector<8x1xf32>
    %40 = math.exp %39 : vector<8x1xf32>
    %cst_26 = arith.constant 1.000000e+00 : f32
    %41 = vector.broadcast %cst_26 : f32 to vector<8x1xf32>
    %42 = arith.addf %41, %40 : vector<8x1xf32>
    %43 = tpu.reciprocal %42 {approx = true} : vector<8x1xf32> -> vector<8x1xf32>
    %c0_27 = arith.constant 0 : index
    %c0_28 = arith.constant 0 : index
    %44 = vector.load %arg12[%c0_27, %c0_28] : memref<8x1xf32, #tpu.memory_space<vmem>>, vector<8x1xf32>
    tpu.vector_store %arg12[%c0_27, %c0_28], %43 {strides = array<i32>} : memref<8x1xf32, #tpu.memory_space<vmem>>, vector<8x1xf32>,
    return
  }
  func.func @transform_0(%arg0: i32) -> (i32, i32) {
    %c0_i32 = arith.constant 0 : i32
    %c0_i32_0 = arith.constant 0 : i32
    return %arg0, %c0_i32 : i32, i32
  }
  func.func @transform_1(%arg0: i32) -> (i32, i32) {
    %c0_i32 = arith.constant 0 : i32
    %c0_i32_0 = arith.constant 0 : i32
    %c0_i32_1 = arith.constant 0 : i32
    return %c0_i32, %c0_i32_0 : i32, i32
  }
  func.func @transform_2(%arg0: i32) -> (i32, i32) {
    %c0_i32 = arith.constant 0 : i32
    %c0_i32_0 = arith.constant 0 : i32
    %c0_i32_1 = arith.constant 0 : i32
    return %c0_i32, %c0_i32_0 : i32, i32
  }
  func.func @transform_3(%arg0: i32) -> (i32, i32) {
    %c0_i32 = arith.constant 0 : i32
    %c0_i32_0 = arith.constant 0 : i32
    %c0_i32_1 = arith.constant 0 : i32
    return %c0_i32, %c0_i32_0 : i32, i32
  }
  func.func @transform_4(%arg0: i32) -> (i32, i32) {
    %c0_i32 = arith.constant 0 : i32
    %c0_i32_0 = arith.constant 0 : i32
    %c0_i32_1 = arith.constant 0 : i32
    return %c0_i32, %c0_i32_0 : i32, i32
  }
  func.func @transform_5(%arg0: i32) -> (i32, i32) {
    %c0_i32 = arith.constant 0 : i32
    %c0_i32_0 = arith.constant 0 : i32
    %c0_i32_1 = arith.constant 0 : i32
    return %c0_i32, %c0_i32_0 : i32, i32
  }
  func.func @transform_6(%arg0: i32) -> (i32, i32) {
    %c0_i32 = arith.constant 0 : i32
    %c0_i32_0 = arith.constant 0 : i32
    %c0_i32_1 = arith.constant 0 : i32
    return %c0_i32, %c0_i32_0 : i32, i32
  }
  func.func @transform_7(%arg0: i32) -> (i32, i32) {
    %c0_i32 = arith.constant 0 : i32
    %c0_i32_0 = arith.constant 0 : i32
    %c0_i32_1 = arith.constant 0 : i32
    return %c0_i32, %c0_i32_0 : i32, i32
  }
  func.func @transform_8(%arg0: i32) -> (i32, i32) {
    %c0_i32 = arith.constant 0 : i32
    %c0_i32_0 = arith.constant 0 : i32
    %c0_i32_1 = arith.constant 0 : i32
    return %c0_i32, %c0_i32_0 : i32, i32
  }
  func.func @transform_9(%arg0: i32) -> (i32, i32) {
    %c0_i32 = arith.constant 0 : i32
    %c0_i32_0 = arith.constant 0 : i32
    %c0_i32_1 = arith.constant 0 : i32
    return %c0_i32, %c0_i32_0 : i32, i32
  }
  func.func @transform_10(%arg0: i32) -> (i32, i32) {
    %c0_i32 = arith.constant 0 : i32
    %c0_i32_0 = arith.constant 0 : i32
    %c0_i32_1 = arith.constant 0 : i32
    return %c0_i32, %c0_i32_0 : i32, i32
  }
  func.func @transform_11(%arg0: i32) -> (i32, i32) {
    %c0_i32 = arith.constant 0 : i32
    %c0_i32_0 = arith.constant 0 : i32
    return %arg0, %c0_i32 : i32, i32
  }
}

</mosaic_0001>

<llo_original>
// kernel: tpu_custom_call.1
$region0: #{tpu_custom_call.1}
  #allocation0 [shape = 'u32[]', space=smem, size = 0x4, offset = 0x4, fixed_abs, tag = 'smem constant byte address 0x4 - core index']
  #allocation1 [shape = 'u32[72,128]{1,0:T(1,128)}', space=vmem, size = 0x9000, scoped, tag = 'internal scratch']
  #allocation2 [shape = 'f32[1,1]{1,0:T(1,128)S(1)}', space=vmem, size = 0x200, scoped, tag = 'scoped memory for tpu_custom_call.1']
  %s0 = inlined_call_operand.hbm [shape: bf16[8,64], index: 0, kind: input, shape index: {}]
  %s1 = inlined_call_operand.hbm [shape: bf16[64,256], index: 1, kind: input, shape index: {}]
  %s2 = inlined_call_operand.vmem [shape: f32[1,256], index: 2, kind: input, shape index: {}]
  %s3 = inlined_call_operand.vmem [shape: f32[1,256], index: 3, kind: input, shape index: {}]
  %s4 = inlined_call_operand.hbm [shape: f32[1,256], index: 4, kind: input, shape index: {}]
  %s5 = inlined_call_operand.hbm [shape: bf16[256,128], index: 5, kind: input, shape index: {}]
  %s6 = inlined_call_operand.vmem [shape: f32[1,128], index: 6, kind: input, shape index: {}]
  %s7 = inlined_call_operand.vmem [shape: f32[1,128], index: 7, kind: input, shape index: {}]
  %s8 = inlined_call_operand.vmem [shape: f32[1,128], index: 8, kind: input, shape index: {}]
  %s9 = inlined_call_operand.vmem [shape: f32[1,128], index: 9, kind: input, shape index: {}]
  %s10 = inlined_call_operand.<no memory space> [shape: f32[1,1], index: 10, kind: input, shape index: {}]
  %s11 = inlined_call_operand.vmem [shape: f32[8,1], index: 11, kind: output, shape index: {}]
  %s12 = sld [smem:[#allocation0]]
  $region70: #{tpu_custom_call.1} parent=0
    _
  %s14 = ssub.s32 1, %s12
  %s15 = scalar_select 0, %s14, %s12
  %v16 = vstv %s10
  %17 = vst [vmem:[#allocation2] sm:$0x1] %v16
  $region1: #{tpu_custom_call.1} parent=0
    #allocation3 [shape = 'u8[2048]{0}', space=vmem, size = 0x800, scoped, tag = 'input window, operand 0, single buffered']
    #allocation4 [shape = 's32[1]{0}', space=sflag, size = 0x4, scoped, tag = 'scoped memory for tpu_custom_call.1']
    #allocation5 [shape = 'u8[32768]{0}', space=vmem, size = 0x8000, scoped, tag = 'input window, operand 1, single buffered']
    #allocation6 [shape = 's32[1]{0}', space=sflag, size = 0x4, scoped, tag = 'scoped memory for tpu_custom_call.1']
    #allocation7 [shape = 'u8[1024]{0}', space=vmem, size = 0x400, scoped, tag = 'input window, operand 4, single buffered']
    #allocation8 [shape = 'u8[65536]{0}', space=vmem, size = 0x10000, scoped, tag = 'input window, operand 5, single buffered']
    #allocation9 [shape = 's32[1]{0}', space=sflag, size = 0x4, scoped, tag = 'scoped memory for tpu_custom_call.1']
    %18 = vsyncpa [#allocation4], 0
    %19 = vsyncpa [#allocation6], 0
    %20 = vsyncpa [#allocation9], 0
    // Predicated region
    $region2: #{tpu_custom_call.1} parent=1 // pred_check
      _
    $region3: #{tpu_custom_call.1} parent=1 // pred_check_branch
      %22 = sbr.rel (0) target = $region5
    $region4: #{tpu_custom_call.1} parent=1 // pred_region
      %24 = vsyncadd [#allocation4], 0
      %s26 = sshll.u32 %s0, 4
      %s27 = int_to_ptr.hbm [resolvable:$true] %s26
      %s28 = sshll.u32 [#allocation3], 4
      %s29 = int_to_ptr.vmem [resolvable:$true] %s28
      %31 = dma.hbm_to_vmem [thread:$0]  %s27, 64, %s29, [#allocation4]
    $region5: #{tpu_custom_call.1} parent=1 // pred_fallthru
      _
    // Predicated region
    $region6: #{tpu_custom_call.1} parent=1 // pred_check
      _
    $region7: #{tpu_custom_call.1} parent=1 // pred_check_branch
      %33 = sbr.rel (0) target = $region9
    $region8: #{tpu_custom_call.1} parent=1 // pred_region
      %35 = vsyncadd [#allocation6], 0
      %s36 = sshll.u32 %s1, 4
      %s37 = int_to_ptr.hbm [resolvable:$true] %s36
      %s38 = sshll.u32 [#allocation5], 4
      %s39 = int_to_ptr.vmem [resolvable:$true] %s38
      %44 = dma.hbm_to_vmem [thread:$0]  %s37, 1024, %s39, [#allocation6], 128, 128, 8
    $region9: #{tpu_custom_call.1} parent=1 // pred_fallthru
      _
    // Predicated region
    $region10: #{tpu_custom_call.1} parent=1 // pred_check
      _
    $region11: #{tpu_custom_call.1} parent=1 // pred_check_branch
      %46 = sbr.rel (0) target = $region13
    $region12: #{tpu_custom_call.1} parent=1 // pred_region
      _
    $region13: #{tpu_custom_call.1} parent=1 // pred_fallthru
      _
    // Predicated region
    $region14: #{tpu_custom_call.1} parent=1 // pred_check
      _
    $region15: #{tpu_custom_call.1} parent=1 // pred_check_branch
      %48 = sbr.rel (0) target = $region17
    $region16: #{tpu_custom_call.1} parent=1 // pred_region
      _
    $region17: #{tpu_custom_call.1} parent=1 // pred_fallthru
      _
    // Predicated region
    $region18: #{tpu_custom_call.1} parent=1 // pred_check
      _
    $region19: #{tpu_custom_call.1} parent=1 // pred_check_branch
      %50 = sbr.rel (0) target = $region21
    $region20: #{tpu_custom_call.1} parent=1 // pred_region
      %52 = vsyncadd [#allocation6], 0
      %s54 = sshll.u32 %s4, 4
      %s55 = int_to_ptr.hbm [resolvable:$true] %s54
      %s56 = sshll.u32 [#allocation7], 4
      %s57 = int_to_ptr.vmem [resolvable:$true] %s56
      %59 = dma.hbm_to_vmem [thread:$0]  %s55, 32, %s57, [#allocation6]
    $region21: #{tpu_custom_call.1} parent=1 // pred_fallthru
      _
    // Predicated region
    $region22: #{tpu_custom_call.1} parent=1 // pred_check
      _
    $region23: #{tpu_custom_call.1} parent=1 // pred_check_branch
      %61 = sbr.rel (0) target = $region25
    $region24: #{tpu_custom_call.1} parent=1 // pred_region
      %63 = vsyncadd [#allocation9], 0
      %s64 = sshll.u32 %s5, 4
      %s65 = int_to_ptr.hbm [resolvable:$true] %s64
      %s66 = sshll.u32 [#allocation8], 4
      %s67 = int_to_ptr.vmem [resolvable:$true] %s66
      %72 = dma.hbm_to_vmem [thread:$0]  %s65, 2048, %s67, [#allocation9], 64, 64, 4
    $region25: #{tpu_custom_call.1} parent=1 // pred_fallthru
      _
    // Predicated region
    $region26: #{tpu_custom_call.1} parent=1 // pred_check
      _
    $region27: #{tpu_custom_call.1} parent=1 // pred_check_branch
      %74 = sbr.rel (0) target = $region29
    $region28: #{tpu_custom_call.1} parent=1 // pred_region
      _
    $region29: #{tpu_custom_call.1} parent=1 // pred_fallthru
      _
    // Predicated region
    $region30: #{tpu_custom_call.1} parent=1 // pred_check
      _
    $region31: #{tpu_custom_call.1} parent=1 // pred_check_branch
      %76 = sbr.rel (0) target = $region33
    $region32: #{tpu_custom_call.1} parent=1 // pred_region
      _
    $region33: #{tpu_custom_call.1} parent=1 // pred_fallthru
      _
    // Predicated region
    $region34: #{tpu_custom_call.1} parent=1 // pred_check
      _
    $region35: #{tpu_custom_call.1} parent=1 // pred_check_branch
      %78 = sbr.rel (0) target = $region37
    $region36: #{tpu_custom_call.1} parent=1 // pred_region
      _
    $region37: #{tpu_custom_call.1} parent=1 // pred_fallthru
      _
    // Predicated region
    $region38: #{tpu_custom_call.1} parent=1 // pred_check
      _
    $region39: #{tpu_custom_call.1} parent=1 // pred_check_branch
      %80 = sbr.rel (0) target = $region41
    $region40: #{tpu_custom_call.1} parent=1 // pred_region
      _
    $region41: #{tpu_custom_call.1} parent=1 // pred_fallthru
      _
    // Predicated region
    $region42: #{tpu_custom_call.1} parent=1 // pred_check
      _
    $region43: #{tpu_custom_call.1} parent=1 // pred_check_branch
      %82 = sbr.rel (0) target = $region45
    $region44: #{tpu_custom_call.1} parent=1 // pred_region
      _
    $region45: #{tpu_custom_call.1} parent=1 // pred_fallthru
      _
    // Predicated region
    $region46: #{tpu_custom_call.1} parent=1 // pred_check
      _
    $region47: #{tpu_custom_call.1} parent=1 // pred_check_branch
      %84 = sbr.rel (0) target = $region49
    $region48: #{tpu_custom_call.1} parent=1 // pred_region
      %86 = dma.done [#allocation4], 64
    $region49: #{tpu_custom_call.1} parent=1 // pred_fallthru
      _
    // Predicated region
    $region50: #{tpu_custom_call.1} parent=1 // pred_check
      _
    $region51: #{tpu_custom_call.1} parent=1 // pred_check_branch
      %88 = sbr.rel (0) target = $region53
    $region52: #{tpu_custom_call.1} parent=1 // pred_region
      %90 = dma.done [#allocation6], 1024
    $region53: #{tpu_custom_call.1} parent=1 // pred_fallthru
      _
    // Predicated region
    $region54: #{tpu_custom_call.1} parent=1 // pred_check
      _
    $region55: #{tpu_custom_call.1} parent=1 // pred_check_branch
      %92 = sbr.rel (0) target = $region57
    $region56: #{tpu_custom_call.1} parent=1 // pred_region
      %94 = dma.done [#allocation6], 32
    $region57: #{tpu_custom_call.1} parent=1 // pred_fallthru
      _
    // Predicated region
    $region58: #{tpu_custom_call.1} parent=1 // pred_check
      _
    $region59: #{tpu_custom_call.1} parent=1 // pred_check_branch
      %96 = sbr.rel (0) target = $region61
    $region60: #{tpu_custom_call.1} parent=1 // pred_region
      %98 = dma.done [#allocation9], 2048
    $region61: #{tpu_custom_call.1} parent=1 // pred_fallthru
      _
    %v100 = vld [vmem:[#allocation3] sm:$0xf]
    %v101 = vld [vmem:[#allocation5] sm:$0xff]
    %v102 = vld [vmem:[#allocation5 + $0x8] sm:$0xff]
    %v103 = vld [vmem:[#allocation5 + $0x10] sm:$0xff]
    %v104 = vld [vmem:[#allocation5 + $0x18] sm:$0xff]
    %v105 = vld [vmem:[#allocation5 + $0x20] sm:$0xff]
    %v106 = vld [vmem:[#allocation5 + $0x28] sm:$0xff]
    %v107 = vld [vmem:[#allocation5 + $0x30] sm:$0xff]
    %v108 = vld [vmem:[#allocation5 + $0x38] sm:$0xff]
    %v109 = vld [vmem:[%s2] sm:$0x3]
    %v111 = vperm.slane %v109, 0
    %v112 = vperm.slane %v109, 1
    %v123 = vunpack.c.l.b16 %v101
    %v124 = vunpack.c.h.b16 %v101
    %v125 = vunpack.c.l.b16 %v102
    %v126 = vunpack.c.h.b16 %v102
    %v127 = vunpack.c.l.b16 %v103
    %v128 = vunpack.c.h.b16 %v103
    %v129 = vunpack.c.l.b16 %v104
    %v130 = vunpack.c.h.b16 %v104
    %v131 = vunpack.c.l.b16 %v105
    %v132 = vunpack.c.h.b16 %v105
    %v133 = vunpack.c.l.b16 %v106
    %v134 = vunpack.c.h.b16 %v106
    %v135 = vunpack.c.l.b16 %v107
    %v136 = vunpack.c.h.b16 %v107
    %v137 = vunpack.c.l.b16 %v108
    %v138 = vunpack.c.h.b16 %v108
    %v139 = vpack.c.b16 %v125, %v123
    %v140 = vpack.c.b16 %v126, %v124
    %v141 = vpack.c.b16 %v129, %v127
    %v142 = vpack.c.b16 %v130, %v128
    %v143 = vpack.c.b16 %v133, %v131
    %v144 = vpack.c.b16 %v134, %v132
    %v145 = vpack.c.b16 %v137, %v135
    %v146 = vpack.c.b16 %v138, %v136
    %vm155 = vcmask 523264
    %v157 = vsel %vm155, %v100, 0
    %159 = vmatpush.bf16.msra.mxu0 0
    %160 = vmatpush.bf16.msra.mxu0 0
    %161 = vmatpush.bf16.msra.mxu0 0
    %162 = vmatpush.bf16.msra.mxu0 0
    %163 = vmatpush.bf16.msra.mxu0 %v145
    %164 = vmatpush.bf16.msra.mxu0 %v143
    %165 = vmatpush.bf16.msra.mxu0 %v141
    %166 = vmatpush.bf16.msra.mxu0 %v139
    %167 = vmatmul.bf16.gmra.mxu0 %v157
    %v168 = vpop.f32.mrf.mxu0
    %v169 = vadd.f32 %v111, %v168
    %v170 = vpop.f32.mrf.mxu0
    %171 = vdwg.mxu0
    %172 = vmatpush.bf16.msra.mxu0 0
    %173 = vmatpush.bf16.msra.mxu0 0
    %174 = vmatpush.bf16.msra.mxu0 0
    %175 = vmatpush.bf16.msra.mxu0 0
    %176 = vmatpush.bf16.msra.mxu0 %v146
    %177 = vmatpush.bf16.msra.mxu0 %v144
    %178 = vmatpush.bf16.msra.mxu0 %v142
    %179 = vmatpush.bf16.msra.mxu0 %v140
    %180 = vmatmul.bf16.gmra.mxu0 %v157
    %v181 = vpop.f32.mrf.mxu0
    %v182 = vadd.f32 %v112, %v181
    %v183 = vpop.f32.mrf.mxu0
    %184 = vdwg.mxu0
    %v185 = vmul.f32 %v169, 0.01
    %v186 = vmul.f32 %v182, 0.01
    %v187 = vmax.f32 %v169, %v185
    %v188 = vmax.f32 %v182, %v186
    %v189 = vld [vmem:[%s3] sm:$0x3]
    %v191 = vperm.slane %v189, 0
    %v192 = vperm.slane %v189, 1
    %v195 = vmul.f32 %v187, %v191
    %v196 = vmul.f32 %v188, %v192
    %v197 = vld [vmem:[#allocation7] sm:$0x3]
    %v199 = vperm.slane %v197, 0
    %v200 = vperm.slane %v197, 1
    %v203 = vadd.f32 %v195, %v199
    %v204 = vadd.f32 %v196, %v200
    %v205 = vpack.c.bf16 %v203, %v203
    %v206 = vpack.c.bf16 %v204, %v204
    %v207 = vld [vmem:[#allocation8] sm:$0xf]
    %v208 = vld [vmem:[#allocation8 + $0x4] sm:$0xf]
    %v209 = vld [vmem:[#allocation8 + $0x8] sm:$0xf]
    %v210 = vld [vmem:[#allocation8 + $0xc] sm:$0xf]
    %v211 = vld [vmem:[#allocation8 + $0x10] sm:$0xf]
    %v212 = vld [vmem:[#allocation8 + $0x14] sm:$0xf]
    %v213 = vld [vmem:[#allocation8 + $0x18] sm:$0xf]
    %v214 = vld [vmem:[#allocation8 + $0x1c] sm:$0xf]
    %v215 = vld [vmem:[#allocation8 + $0x20] sm:$0xf]
    %v216 = vld [vmem:[#allocation8 + $0x24] sm:$0xf]
    %v217 = vld [vmem:[#allocation8 + $0x28] sm:$0xf]
    %v218 = vld [vmem:[#allocation8 + $0x2c] sm:$0xf]
    %v219 = vld [vmem:[#allocation8 + $0x30] sm:$0xf]
    %v220 = vld [vmem:[#allocation8 + $0x34] sm:$0xf]
    %v221 = vld [vmem:[#allocation8 + $0x38] sm:$0xf]
    %v222 = vld [vmem:[#allocation8 + $0x3c] sm:$0xf]
    %v223 = vld [vmem:[#allocation8 + $0x40] sm:$0xf]
    %v224 = vld [vmem:[#allocation8 + $0x44] sm:$0xf]
    %v225 = vld [vmem:[#allocation8 + $0x48] sm:$0xf]
    %v226 = vld [vmem:[#allocation8 + $0x4c] sm:$0xf]
    %v227 = vld [vmem:[#allocation8 + $0x50] sm:$0xf]
    %v228 = vld [vmem:[#allocation8 + $0x54] sm:$0xf]
    %v229 = vld [vmem:[#allocation8 + $0x58] sm:$0xf]
    %v230 = vld [vmem:[#allocation8 + $0x5c] sm:$0xf]
    %v231 = vld [vmem:[#allocation8 + $0x60] sm:$0xf]
    %v232 = vld [vmem:[#allocation8 + $0x64] sm:$0xf]
    %v233 = vld [vmem:[#allocation8 + $0x68] sm:$0xf]
    %v234 = vld [vmem:[#allocation8 + $0x6c] sm:$0xf]
    %v235 = vld [vmem:[#allocation8 + $0x70] sm:$0xf]
    %v236 = vld [vmem:[#allocation8 + $0x74] sm:$0xf]
    %v237 = vld [vmem:[#allocation8 + $0x78] sm:$0xf]
    %v238 = vld [vmem:[#allocation8 + $0x7c] sm:$0xf]
    %v239 = vld [vmem:[%s6] sm:$0x1]
    %v241 = vperm.slane %v239, 0
    %v275 = vunpack.c.l.b16 %v207
    %v276 = vunpack.c.l.b16 %v208
    %v277 = vunpack.c.l.b16 %v209
    %v278 = vunpack.c.l.b16 %v210
    %v279 = vunpack.c.l.b16 %v211
    %v280 = vunpack.c.l.b16 %v212
    %v281 = vunpack.c.l.b16 %v213
    %v282 = vunpack.c.l.b16 %v214
    %v283 = vunpack.c.l.b16 %v215
    %v284 = vunpack.c.l.b16 %v216
    %v285 = vunpack.c.l.b16 %v217
    %v286 = vunpack.c.l.b16 %v218
    %v287 = vunpack.c.l.b16 %v219
    %v288 = vunpack.c.l.b16 %v220
    %v289 = vunpack.c.l.b16 %v221
    %v290 = vunpack.c.l.b16 %v222
    %v291 = vunpack.c.l.b16 %v223
    %v292 = vunpack.c.l.b16 %v224
    %v293 = vunpack.c.l.b16 %v225
    %v294 = vunpack.c.l.b16 %v226
    %v295 = vunpack.c.l.b16 %v227
    %v296 = vunpack.c.l.b16 %v228
    %v297 = vunpack.c.l.b16 %v229
    %v298 = vunpack.c.l.b16 %v230
    %v299 = vunpack.c.l.b16 %v231
    %v300 = vunpack.c.l.b16 %v232
    %v301 = vunpack.c.l.b16 %v233
    %v302 = vunpack.c.l.b16 %v234
    %v303 = vunpack.c.l.b16 %v235
    %v304 = vunpack.c.l.b16 %v236
    %v305 = vunpack.c.l.b16 %v237
    %v306 = vunpack.c.l.b16 %v238
    %v307 = vpack.c.b16 %v276, %v275
    %v308 = vpack.c.b16 %v278, %v277
    %v309 = vpack.c.b16 %v280, %v279
    %v310 = vpack.c.b16 %v282, %v281
    %v311 = vpack.c.b16 %v284, %v283
    %v312 = vpack.c.b16 %v286, %v285
    %v313 = vpack.c.b16 %v288, %v287
    %v314 = vpack.c.b16 %v290, %v289
    %v315 = vpack.c.b16 %v292, %v291
    %v316 = vpack.c.b16 %v294, %v293
    %v317 = vpack.c.b16 %v296, %v295
    %v318 = vpack.c.b16 %v298, %v297
    %v319 = vpack.c.b16 %v300, %v299
    %v320 = vpack.c.b16 %v302, %v301
    %v321 = vpack.c.b16 %v304, %v303
    %v322 = vpack.c.b16 %v306, %v305
    %339 = vmatpush.bf16.msra.mxu0 %v314
    %340 = vmatpush.bf16.msra.mxu0 %v313
    %341 = vmatpush.bf16.msra.mxu0 %v312
    %342 = vmatpush.bf16.msra.mxu0 %v311
    %343 = vmatpush.bf16.msra.mxu0 %v310
    %344 = vmatpush.bf16.msra.mxu0 %v309
    %345 = vmatpush.bf16.msra.mxu0 %v308
    %346 = vmatpush.bf16.msra.mxu0 %v307
    %347 = vmatmul.bf16.gmra.mxu0 %v205
    %v348 = vpop.f32.mrf.mxu0
    %v349 = vadd.f32 %v241, %v348
    %v350 = vpop.f32.mrf.mxu0
    %351 = vdwg.mxu0
    %352 = vmatpush.bf16.msra.mxu0 %v322
    %353 = vmatpush.bf16.msra.mxu0 %v321
    %354 = vmatpush.bf16.msra.mxu0 %v320
    %355 = vmatpush.bf16.msra.mxu0 %v319
    %356 = vmatpush.bf16.msra.mxu0 %v318
    %357 = vmatpush.bf16.msra.mxu0 %v317
    %358 = vmatpush.bf16.msra.mxu0 %v316
    %359 = vmatpush.bf16.msra.mxu0 %v315
    %360 = vmatmul.bf16.gmra.mxu0 %v206
    %v361 = vpop.f32.mrf.mxu0
    %v362 = vadd.f32 %v349, %v361
    %v363 = vpop.f32.mrf.mxu0
    %364 = vdwg.mxu0
    %v365 = vmul.f32 %v362, 0.01
    %v366 = vmax.f32 %v362, %v365
    %v367 = vld [vmem:[%s7] sm:$0x1]
    %v369 = vperm.slane %v367, 0
    %v371 = vmul.f32 %v366, %v369
    %v372 = vld [vmem:[%s8] sm:$0x1]
    %v374 = vperm.slane %v372, 0
    %v376 = vadd.f32 %v371, %v374
    %v377 = vld [vmem:[%s9] sm:$0x1]
    %v379 = vperm.slane %v377, 0
    %v381 = vmul.f32 %v376, %v379
    %382 = vadd.xlane.f32.xlu0 %v381
    %v383 = vpop.xlane.xlu0 %382
    %v384 = vld [vmem:[#allocation2] sm:$0x1]
    %v386 = vperm.slane %v384, 0
    %v388 = vadd.f32 %v383, %v386
    %v389 = vsub.f32 0.0, %v388
    %v390 = vmul.f32 %v389, 1.442695
    %v391 = vpow.pop %v390
    %v392 = vadd.f32 %v391, 1.0
    %v393 = vrcp.pop %v392
    %vm394 = vcmask 7168
    %395 = vst.msk [vmem:[%s11] sm:$0xff] %vm394, %v393
    // Predicated region
    $region62: #{tpu_custom_call.1} parent=1 // pred_check
      _
    $region63: #{tpu_custom_call.1} parent=1 // pred_check_branch
      %397 = sbr.rel (0) target = $region65
    $region64: #{tpu_custom_call.1} parent=1 // pred_region
      _
    $region65: #{tpu_custom_call.1} parent=1 // pred_fallthru
      _
    // Predicated region
    $region66: #{tpu_custom_call.1} parent=1 // pred_check
      _
    $region67: #{tpu_custom_call.1} parent=1 // pred_check_branch
      %399 = sbr.rel (0) target = $region69
    $region68: #{tpu_custom_call.1} parent=1 // pred_region
      _
    $region69: #{tpu_custom_call.1} parent=1 // pred_fallthru
      _
    %400 = vsyncpa [#allocation4], 1
    %401 = vsyncpa [#allocation6], 1
    %402 = vsyncpa [#allocation9], 1

</llo_original>
